<compile_context>
chip_gen: v6e
topology: v6e:2x2x1
jax: 0.10.0
libtpu: 0.0.40
codegen_flags: <defaults>
</compile_context>

<pallas_src>
import jax
import jax.numpy as jnp
from jax.experimental import pallas as pl
from jax.experimental.pallas import tpu as pltpu


def _round_up(x: int, m: int) -> int:
    return ((x + m - 1) // m) * m


def _choose_tile_m(m: int, cap: int = 4096) -> int:
    """Row tile: multiple of 8, capped, with >= 2 grid steps when M allows."""
    m8 = _round_up(max(m, 1), 8)
    tm = min(cap, m8)
    # Give both v7x TensorCores work when there are enough rows for 2 tiles.
    if m8 >= 16 and pl.cdiv(m8, tm) < 2:
        tm = _round_up(pl.cdiv(m8, 2), 8)
    return tm


def _tower_kernel(x_ref, *refs):
    """refs = (w0, b0, w1, b1, ..., out). Layers unrolled at trace time."""
    o_ref = refs[-1]
    param_refs = refs[:-1]
    h = x_ref[...].astype(jnp.float32)
    for idx in range(0, len(param_refs), 2):
        w = param_refs[idx][...].astype(jnp.float32)
        b = param_refs[idx + 1][...].astype(jnp.float32)
        h = jnp.dot(h, w, preferred_element_type=jnp.float32) + b
    o_ref[...] = h.astype(o_ref.dtype)


def tower_forward(x: jax.Array, params) -> jax.Array:
    """Apply the Tower over the last dim of x with one fused Pallas kernel.

    params: list of (w, b) with w stored as (in_features, out_features), i.e.
    W^T relative to PyTorch, so y = x @ w + b.
    """
    assert len(params) >= 1
    lead = x.shape[:-1]
    x2d = x.reshape(-1, x.shape[-1])
    m, k = x2d.shape
    assert params[0][0].shape[0] == k, (params[0][0].shape, k)
    n_out = params[-1][0].shape[1]

    tm = _choose_tile_m(m)
    grid = (pl.cdiv(m, tm),)

    # x is the only streamed input; every weight/bias is a resident
    # full-extent block (constant index_map -> DMA'd once, stays in VMEM).
    in_specs = [pl.BlockSpec((tm, k), lambda i: (i, 0))]
    operands = [x2d]
    for w, b in params:
        kin, nout = w.shape
        in_specs.append(pl.BlockSpec((kin, nout), lambda i: (0, 0)))
        in_specs.append(pl.BlockSpec((1, nout), lambda i: (0, 0)))
        operands.append(w)
        operands.append(b.reshape(1, nout))

    out = pl.pallas_call(
        _tower_kernel,
        out_shape=jax.ShapeDtypeStruct((m, n_out), x.dtype),
        grid_spec=pltpu.PrefetchScalarGridSpec(
            num_scalar_prefetch=0,
            grid=grid,
            in_specs=in_specs,
            out_specs=pl.BlockSpec((tm, n_out), lambda i: (i, 0)),
        ),
        compiler_params=pltpu.CompilerParams(
            dimension_semantics=("parallel",),  # split row tiles across TCs
        ),
    )(*operands)
    return out.reshape(*lead, n_out)


def _make_params(key, in_features: int, length: int, out_features: int = 10):
    """Deterministic PyTorch-Linear-style params, stored as (in, out) = W^T."""
    params = []
    in_f = in_features
    for _ in range(length):
        key, kw, kb = jax.random.split(key, 3)
        bound = 1.0 / (in_f ** 0.5)
        w = jax.random.uniform(kw, (in_f, out_features), jnp.float32, -bound, bound)
        b = jax.random.uniform(kb, (out_features,), jnp.float32, -bound, bound)
        params.append((w, b))
        in_f = out_features
    return params


if __name__ == "__main__":
    key = jax.random.PRNGKey(0)
    out_features = 10
    batch, hidden = 2, 32

    kx, kp = jax.random.split(key)
    x = jax.random.normal(kx, (batch, hidden), dtype=jnp.float32)

    for length in (1, 3):  # default Tower() plus a multi-layer case (fusion path)
        params = _make_params(jax.random.fold_in(kp, length), hidden, length,
                              out_features)

        y = tower_forward(x, params)
        jax.block_until_ready(y)

        # Pure-JAX reference (same per-layer composition, f32 throughout).
        ref = x
        for w, b in params:
            ref = ref @ w + b

        assert y.shape == (batch, out_features), (y.shape, length)
        assert y.dtype == x.dtype
        assert jnp.allclose(y, ref, atol=1e-5, rtol=1e-5), f"mismatch length={length}"

    print("KERNEL_OK")
</pallas_src>

<mosaic_0001>
module attributes {stable_mosaic.version = 11 : i64} {
  func.func @_tower_kernel(%arg0: i32, %arg1: memref<8x32xf32, #tpu.memory_space<vmem>>, %arg2: memref<32x10xf32, #tpu.memory_space<vmem>>, %arg3: memref<1x10xf32, #tpu.memory_space<vmem>>, %arg4: memref<8x10xf32, #tpu.memory_space<vmem>>) attributes {dimension_semantics = [#tpu.dimension_semantics<parallel>], iteration_bounds = array<i64: 1>, scalar_prefetch = 0 : i64, scratch_operands = 0 : i64, tpu.core_type = #tpu.core_type<tc>, window_params = [{transform_indices = @transform_0, window_bounds = array<i64: 8, 32>}, {pipeline_mode = #tpu.pipeline_mode<synchronous>, transform_indices = @transform_1, window_bounds = array<i64: 32, 10>}, {pipeline_mode = #tpu.pipeline_mode<synchronous>, transform_indices = @transform_2, window_bounds = array<i64: 1, 10>}, {transform_indices = @transform_3, window_bounds = array<i64: 8, 10>}]} {
    %c0 = arith.constant 0 : index
    %c0_0 = arith.constant 0 : index
    %0 = vector.load %arg1[%c0, %c0_0] : memref<8x32xf32, #tpu.memory_space<vmem>>, vector<8x32xf32>
    %c0_1 = arith.constant 0 : index
    %c0_2 = arith.constant 0 : index
    %1 = vector.load %arg2[%c0_1, %c0_2] : memref<32x10xf32, #tpu.memory_space<vmem>>, vector<32x10xf32>
    %c0_3 = arith.constant 0 : index
    %c0_4 = arith.constant 0 : index
    %2 = vector.load %arg3[%c0_3, %c0_4] : memref<1x10xf32, #tpu.memory_space<vmem>>, vector<1x10xf32>
    %cst = arith.constant dense<0.000000e+00> : vector<8x10xf32>
    %3 = tpu.matmul %0, %1, %cst {dimension_numbers = #tpu.dot_dimension_numbers<[1], [0], [0], [1], [0, 0, 1, 1], [], []>} : vector<8x32xf32>, vector<32x10xf32>, vector<8x10xf32> -> vector<8x10xf32>
    %4 = vector.broadcast %2 : vector<1x10xf32> to vector<8x10xf32>
    %5 = arith.addf %3, %4 : vector<8x10xf32>
    %c0_5 = arith.constant 0 : index
    %c0_6 = arith.constant 0 : index
    %6 = vector.load %arg4[%c0_5, %c0_6] : memref<8x10xf32, #tpu.memory_space<vmem>>, vector<8x10xf32>
    tpu.vector_store %arg4[%c0_5, %c0_6], %5 {strides = array<i32>} : memref<8x10xf32, #tpu.memory_space<vmem>>, vector<8x10xf32>,
    return
  }
  func.func @transform_0(%arg0: i32) -> (i32, i32) {
    %c0_i32 = arith.constant 0 : i32
    %c0_i32_0 = arith.constant 0 : i32
    return %arg0, %c0_i32 : i32, i32
  }
  func.func @transform_1(%arg0: i32) -> (i32, i32) {
    %c0_i32 = arith.constant 0 : i32
    %c0_i32_0 = arith.constant 0 : i32
    %c0_i32_1 = arith.constant 0 : i32
    return %c0_i32, %c0_i32_0 : i32, i32
  }
  func.func @transform_2(%arg0: i32) -> (i32, i32) {
    %c0_i32 = arith.constant 0 : i32
    %c0_i32_0 = arith.constant 0 : i32
    %c0_i32_1 = arith.constant 0 : i32
    return %c0_i32, %c0_i32_0 : i32, i32
  }
  func.func @transform_3(%arg0: i32) -> (i32, i32) {
    %c0_i32 = arith.constant 0 : i32
    %c0_i32_0 = arith.constant 0 : i32
    return %arg0, %c0_i32 : i32, i32
  }
}

</mosaic_0001>

<llo_original>
// kernel: tpu_custom_call.1
$region0: #{tpu_custom_call.1}
  #allocation0 [shape = 'u32[]', space=smem, size = 0x4, offset = 0x4, fixed_abs, tag = 'smem constant byte address 0x4 - core index']
  #allocation1 [shape = 'u32[144,128]{1,0:T(1,128)}', space=vmem, size = 0x12000, scoped, tag = 'internal scratch']
  %s0 = inlined_call_operand.vmem [shape: f32[2,32], index: 0, kind: input, shape index: {}]
  %s1 = inlined_call_operand.vmem [shape: f32[32,10], index: 1, kind: input, shape index: {}]
  %s2 = inlined_call_operand.vmem [shape: f32[1,10], index: 2, kind: input, shape index: {}]
  %s3 = inlined_call_operand.hbm [shape: f32[2,10], index: 3, kind: output, shape index: {}]
  %s4 = sld [smem:[#allocation0]]
  $region22: #{tpu_custom_call.1} parent=0
    _
  %s6 = ssub.s32 1, %s4
  %s7 = scalar_select 0, %s6, %s4
  $region1: #{tpu_custom_call.1} parent=0
    #allocation2 [shape = 'u8[4096]{0}', space=vmem, size = 0x1000, scoped, tag = 'output window, operand 0, single buffered']
    #allocation3 [shape = 's32[1]{0}', space=sflag, size = 0x4, scoped, tag = 'scoped memory for tpu_custom_call.1']
    %8 = vsyncpa [#allocation3], 0
    // Predicated region
    $region2: #{tpu_custom_call.1} parent=1 // pred_check
      _
    $region3: #{tpu_custom_call.1} parent=1 // pred_check_branch
      %10 = sbr.rel (0) target = $region5
    $region4: #{tpu_custom_call.1} parent=1 // pred_region
      _
    $region5: #{tpu_custom_call.1} parent=1 // pred_fallthru
      _
    // Predicated region
    $region6: #{tpu_custom_call.1} parent=1 // pred_check
      _
    $region7: #{tpu_custom_call.1} parent=1 // pred_check_branch
      %12 = sbr.rel (0) target = $region9
    $region8: #{tpu_custom_call.1} parent=1 // pred_region
      _
    $region9: #{tpu_custom_call.1} parent=1 // pred_fallthru
      _
    // Predicated region
    $region10: #{tpu_custom_call.1} parent=1 // pred_check
      _
    $region11: #{tpu_custom_call.1} parent=1 // pred_check_branch
      %14 = sbr.rel (0) target = $region13
    $region12: #{tpu_custom_call.1} parent=1 // pred_region
      _
    $region13: #{tpu_custom_call.1} parent=1 // pred_fallthru
      _
    %v15 = vld [vmem:[%s0] sm:$0xff]
    %v16 = vld [vmem:[%s1] sm:$0xff]
    %v17 = vld [vmem:[%s1 + $0x8] sm:$0xff]
    %v18 = vld [vmem:[%s1 + $0x10] sm:$0xff]
    %v19 = vld [vmem:[%s1 + $0x18] sm:$0xff]
    %v20 = vld [vmem:[%s2] sm:$0x1]
    %v22 = vlaneseq
    %v23 = vshrl.u32 %v22, 7
    %v24 = vsub.s32 0, %v23
    %v25 = vrot.slane %v20, %v24
    %vm27 = vcmask 261120
    %v29 = vsel %vm27, %v15, 0
    %31 = vmatprep.subr.mxu0 0.0
    %32 = vmatpush1.msra.mxu0 0.0
    %33 = vmatprep.subr.mxu0 0.0
    %34 = vmatpush1.msra.mxu0 0.0
    %35 = vmatprep.subr.mxu0 0.0
    %36 = vmatpush1.msra.mxu0 0.0
    %37 = vmatprep.subr.mxu0 0.0
    %38 = vmatpush1.msra.mxu0 0.0
    %39 = vmatprep.subr.mxu0 0.0
    %40 = vmatpush1.msra.mxu0 0.0
    %41 = vmatprep.subr.mxu0 0.0
    %42 = vmatpush1.msra.mxu0 0.0
    %43 = vmatprep.subr.mxu0 0.0
    %44 = vmatpush1.msra.mxu0 0.0
    %45 = vmatprep.subr.mxu0 0.0
    %46 = vmatpush1.msra.mxu0 0.0
    %47 = vmatprep.subr.mxu0 0.0
    %48 = vmatpush1.msra.mxu0 0.0
    %49 = vmatprep.subr.mxu0 0.0
    %50 = vmatpush1.msra.mxu0 0.0
    %51 = vmatprep.subr.mxu0 0.0
    %52 = vmatpush1.msra.mxu0 0.0
    %53 = vmatprep.subr.mxu0 0.0
    %54 = vmatpush1.msra.mxu0 0.0
    %55 = vmatprep.subr.mxu0 0.0
    %56 = vmatpush1.msra.mxu0 %v19
    %57 = vmatprep.subr.mxu0 0.0
    %58 = vmatpush1.msra.mxu0 %v18
    %59 = vmatprep.subr.mxu0 0.0
    %60 = vmatpush1.msra.mxu0 %v17
    %61 = vmatprep.subr.mxu0 0.0
    %62 = vmatpush1.msra.mxu0 %v16
    %63 = vmatprep.subr.mxu0 0.0
    %64 = vmatpush2.msra.mxu0 0.0
    %65 = vmatprep.subr.mxu0 0.0
    %66 = vmatpush2.msra.mxu0 0.0
    %67 = vmatprep.subr.mxu0 0.0
    %68 = vmatpush2.msra.mxu0 0.0
    %69 = vmatprep.subr.mxu0 0.0
    %70 = vmatpush2.msra.mxu0 0.0
    %71 = vmatprep.subr.mxu0 0.0
    %72 = vmatpush2.msra.mxu0 0.0
    %73 = vmatprep.subr.mxu0 0.0
    %74 = vmatpush2.msra.mxu0 0.0
    %75 = vmatprep.subr.mxu0 0.0
    %76 = vmatpush2.msra.mxu0 0.0
    %77 = vmatprep.subr.mxu0 0.0
    %78 = vmatpush2.msra.mxu0 0.0
    %79 = vmatprep.subr.mxu0 0.0
    %80 = vmatpush2.msra.mxu0 0.0
    %81 = vmatprep.subr.mxu0 0.0
    %82 = vmatpush2.msra.mxu0 0.0
    %83 = vmatprep.subr.mxu0 0.0
    %84 = vmatpush2.msra.mxu0 0.0
    %85 = vmatprep.subr.mxu0 0.0
    %86 = vmatpush2.msra.mxu0 0.0
    %87 = vmatprep.subr.mxu0 0.0
    %88 = vmatpush2.msra.mxu0 0.0
    %89 = vmatprep.subr.mxu0 0.0
    %90 = vmatpush2.msra.mxu0 0.0
    %91 = vmatprep.subr.mxu0 0.0
    %92 = vmatpush2.msra.mxu0 0.0
    %93 = vmatprep.subr.mxu0 0.0
    %94 = vmatpush2.msra.mxu0 0.0
    %95 = vmatprep.mubr.f32.mxu0 0.0
    %96 = vmatmul.mubr.f32.gmra.mxu0 %v29
    %v97 = vpop.f32.mrf.mxu0
    %v98 = vadd.f32 %v25, %v97
    %v99 = vpop.f32.mrf.mxu0
    %100 = vdwg.mxu0
    %vm101 = vcmask 80896
    %102 = vst.msk [vmem:[#allocation2] sm:$0xff] %vm101, %v98
    // Predicated region
    $region14: #{tpu_custom_call.1} parent=1 // pred_check
      _
    $region15: #{tpu_custom_call.1} parent=1 // pred_check_branch
      %104 = sbr.rel (0) target = $region17
    $region16: #{tpu_custom_call.1} parent=1 // pred_region
      %s106 = ssub.s32 128, 32
      %107 = vsyncadd [#allocation3], %s106
      %s108 = sshll.u32 [#allocation2], 4
      %s109 = int_to_ptr.vmem [resolvable:$true] %s108
      %114 = dma.vmem_to_hbm [thread:$0]  %s109, 32, %s3, [#allocation3], 32, 32, 2
    $region17: #{tpu_custom_call.1} parent=1 // pred_fallthru
      _
    // Predicated region
    $region18: #{tpu_custom_call.1} parent=1 // pred_check
      _
    $region19: #{tpu_custom_call.1} parent=1 // pred_check_branch
      %116 = sbr.rel (0) target = $region21
    $region20: #{tpu_custom_call.1} parent=1 // pred_region
      %117 = dma.done [#allocation3], 128
    $region21: #{tpu_custom_call.1} parent=1 // pred_fallthru
      _
    %118 = vsyncpa [#allocation3], 1

</llo_original>
